<compile_context>
chip_gen: v7x
topology: tpu7x:2x2x1
jax: 0.10.0
libtpu: 0.0.40
codegen_flags: <defaults>
</compile_context>

<pallas_src>
import functools

import jax
import jax.numpy as jnp
import numpy as np
from jax import lax
from jax.experimental import pallas as pl
from jax.experimental.pallas import tpu as pltpu


# ---------------------------------------------------------------------------
# Hardware / feature queries
# ---------------------------------------------------------------------------
def _tpu_vmem_capacity_bytes():
    """Physical VMEM of the attached TPU generation (conservative default)."""
    try:
        return int(pltpu.get_tpu_info().vmem_capacity_bytes)
    except Exception:
        return 64 << 20          # v7x-sized fallback; safe on every generation


@functools.lru_cache(maxsize=None)
def _dynamic_roll_mode():
    """Feature-detect Mosaic's dynamic lane rotate and its direction.

    Returns:
      +1  pltpu.roll matches np.roll            (out[i] = x[(i - shift) % n])
      -1  pltpu.roll is the opposite convention (out[i] = x[(i + shift) % n])
       0  dynamic roll unavailable -> use the MXU fallback path everywhere.
    """
    lanes = 256                  # two vregs wide: exercises cross-vreg rotation
    base = np.arange(lanes, dtype=np.float32)
    try:
        xp = jnp.asarray(np.tile(base[None, :], (8, 1)))
        shift = jnp.array([3], dtype=jnp.int32)

        def probe(s_ref, x_ref, o_ref):
            o_ref[...] = pltpu.roll(x_ref[...], s_ref[0], 1)

        out = pl.pallas_call(
            probe,
            out_shape=jax.ShapeDtypeStruct((8, lanes), jnp.float32),
            grid_spec=pltpu.PrefetchScalarGridSpec(
                num_scalar_prefetch=1,
                grid=(1,),
                in_specs=[pl.BlockSpec((8, lanes), lambda i, s: (0, 0))],
                out_specs=pl.BlockSpec((8, lanes), lambda i, s: (0, 0)),
            ),
        )(shift, xp)
        row = np.asarray(jax.block_until_ready(out))[0]
        if np.array_equal(row, np.roll(base, 3)):
            return 1
        if np.array_equal(row, np.roll(base, -3)):
            return -1
        return 0
    except Exception:
        return 0


# ---------------------------------------------------------------------------
# Block sizing
# ---------------------------------------------------------------------------
def _pick_block_n(N, per_example_bytes, target_bytes):
    """Examples per grid step: large blocks (multi-MiB) to amortize the
    ~0.35us/step pipeline overhead, but >= 2 grid steps when N >= 2 so
    ("parallel",) can shard the grid across TensorCores (v7x / megacore)."""
    nb = max(1, int(target_bytes // max(per_example_bytes, 1)))
    if N >= 2:
        nb = min(nb, -(-N // 2))
    return int(max(1, min(nb, N, 64)))


def _pick_unroll(nb, per_example_f32_bytes, cap=8):
    if per_example_f32_bytes > (128 << 10):
        return 1
    return int(max(1, min(nb, cap)))


# ---------------------------------------------------------------------------
# Path 1: dynamic roll + masked blend on a lane-dense (C, H*W) layout.
# ---------------------------------------------------------------------------
def _roll_kernel(params_ref, col_ref, row_ref, x_ref, o_ref, *,
                 nb, n_total, H, W, conv, unroll):
    # params_ref: (2*N,) f32 in SMEM: [tx0, ty0, tx1, ty1, ...]
    # col_ref/row_ref: (1, H*W) int32 (w-index / h-index of each flat position)
    # x_ref/o_ref: (nb, C, H*W) blocks covering examples [n0, n0+nb).
    HW = H * W
    n0 = pl.program_id(0) * nb

    wi = col_ref[...]            # loop-invariant, VMEM resident, loaded once
    hi = row_ref[...]

    # Static roll amounts realizing an extra +1 column / +1 row displacement.
    if conv == 1:                # np.roll convention: out[i] = x[i - shift]
        extra_x = (HW - 1) % HW
        extra_y = (HW - W) % HW
    else:                        # opposite convention: out[i] = x[i + shift]
        extra_x = 1 % HW
        extra_y = W % HW

    def amount(disp):
        # Roll amount realizing out[i] = x[(i + disp) mod HW], reduced to [0, HW).
        s = -disp if conv == 1 else disp
        r = lax.rem(s, jnp.int32(HW))
        return jnp.where(r < 0, r + HW, r)

    def body(ib, carry):
        n = n0 + ib

        def work():
            tx = params_ref[2 * n]
            ty = params_ref[2 * n + 1]
            # affine_grid + grid_sample (align_corners=False) -> uniform shift.
            sx = tx * (W * 0.5)
            sy = ty * (H * 0.5)
            dxf = jnp.floor(sx)
            dyf = jnp.floor(sy)
            fx = sx - dxf                      # constant bilinear fractions
            fy = sy - dyf
            dxi = dxf.astype(jnp.int32)
            dyi = dyf.astype(jnp.int32)

            xf = x_ref[ib].astype(jnp.float32)             # (C, HW)

            # --- column (W axis) taps: shift by dxi / dxi+1, zero outside ---
            r0 = pltpu.roll(xf, amount(dxi), 1)
            r1 = pltpu.roll(r0, extra_x, 1)
            m0 = (wi >= -dxi) & (wi <= (W - 1) - dxi)
            m1 = (wi >= -dxi - 1) & (wi <= (W - 2) - dxi)
            cw0 = jnp.where(m0, 1.0 - fx, 0.0)             # (1, HW) f32 weights
            cw1 = jnp.where(m1, fx, 0.0)
            t = r0 * cw0 + r1 * cw1                        # (C, HW) f32

            # --- row (H axis) taps: shift by dyi / dyi+1 rows ----------------
            s0 = pltpu.roll(t, amount(dyi * W), 1)
            s1 = pltpu.roll(s0, extra_y, 1)
            q0 = (hi >= -dyi) & (hi <= (H - 1) - dyi)
            q1 = (hi >= -dyi - 1) & (hi <= (H - 2) - dyi)
            rw0 = jnp.where(q0, 1.0 - fy, 0.0)
            rw1 = jnp.where(q1, fy, 0.0)
            out = s0 * rw0 + s1 * rw1

            o_ref[ib] = out.astype(o_ref.dtype)

        if n_total % nb == 0:
            work()
        else:
            pl.when(n < n_total)(work)
        return carry

    lax.fori_loop(0, nb, body, 0, unroll=unroll)


def _run_roll(x, params_flat, *, nb, grid, unroll, conv, vmem_limit):
    N, C, H, W = map(int, x.shape)
    HW = H * W
    itemsize = jnp.dtype(x.dtype).itemsize

    x_flat = x.reshape(N, C, HW)                       # free view of NCHW
    col_idx = jnp.asarray(np.tile(np.arange(W, dtype=np.int32), H)[None, :])
    row_idx = jnp.asarray(np.repeat(np.arange(H, dtype=np.int32), W)[None, :])

    cost = pl.CostEstimate(
        flops=int(N * C * HW * 12),
        transcendentals=0,
        bytes_accessed=int(2 * N * C * HW * itemsize + params_flat.size * 4),
    )
    kernel = functools.partial(
        _roll_kernel, nb=nb, n_total=N, H=H, W=W, conv=conv, unroll=unroll)

    out_flat = pl.pallas_call(
        kernel,
        out_shape=jax.ShapeDtypeStruct((N, C, HW), x.dtype),
        grid_spec=pltpu.PrefetchScalarGridSpec(
            num_scalar_prefetch=1,
            grid=(grid,),
            in_specs=[
                pl.BlockSpec((1, HW), lambda i, p: (0, 0)),
                pl.BlockSpec((1, HW), lambda i, p: (0, 0)),
                pl.BlockSpec((nb, C, HW), lambda i, p: (i, 0, 0)),
            ],
            out_specs=pl.BlockSpec((nb, C, HW), lambda i, p: (i, 0, 0)),
        ),
        compiler_params=pltpu.CompilerParams(
            dimension_semantics=("parallel",),
            vmem_limit_bytes=vmem_limit,
        ),
        cost_estimate=cost,
    )(params_flat, col_idx, row_idx, x_flat)
    return out_flat.reshape(N, C, H, W)


# ---------------------------------------------------------------------------
# Path 2 (fallback): separable MXU path with (W,W) / (H,H) operators.
# ---------------------------------------------------------------------------
def _matmul_kernel(params_ref, dwx_ref, dwy_ref, x_ref, o_ref, *,
                   nb, n_total, C, H, W, unroll):
    # dwx_ref: (W, W) int32, dwx[i_in, j_out] = i_in - j_out
    # dwy_ref: (H, H) int32, dwy[o_out, i_in] = i_in - o_out
    # x_ref/o_ref: (nb, C, H, W) blocks.
    n0 = pl.program_id(0) * nb
    dwx = dwx_ref[...]
    dwy = dwy_ref[...]

    def body(ib, carry):
        n = n0 + ib

        def work():
            tx = params_ref[2 * n]
            ty = params_ref[2 * n + 1]
            sx = tx * (W * 0.5)
            sy = ty * (H * 0.5)
            dxf = jnp.floor(sx)
            dyf = jnp.floor(sy)
            fx = sx - dxf
            fy = sy - dyf
            dxi = dxf.astype(jnp.int32)
            dyi = dyf.astype(jnp.int32)

            # Small interpolation operators; out-of-range source taps never
            # match an in-range index -> zero weight (padding_mode='zeros').
            wx_t = (jnp.where(dwx == dxi, 1.0 - fx, 0.0)
                    + jnp.where(dwx == dxi + 1, fx, 0.0))       # (W, W)
            wy = (jnp.where(dwy == dyi, 1.0 - fy, 0.0)
                  + jnp.where(dwy == dyi + 1, fy, 0.0))         # (H, H)
            wx_t = wx_t.astype(x_ref.dtype)   # cast only the tiny weights

            for c in range(C):   # (H,H) row operator per channel: C x fewer FLOPs
                xe = x_ref[ib, c]                                       # (H, W)
                t = jnp.dot(xe, wx_t, preferred_element_type=jnp.float32)
                oc = jnp.dot(wy, t, preferred_element_type=jnp.float32)
                o_ref[ib, c] = oc.astype(o_ref.dtype)

        if n_total % nb == 0:
            work()
        else:
            pl.when(n < n_total)(work)
        return carry

    lax.fori_loop(0, nb, body, 0, unroll=unroll)


def _run_matmul(x, params_flat, *, nb, grid, unroll, vmem_limit):
    N, C, H, W = map(int, x.shape)
    itemsize = jnp.dtype(x.dtype).itemsize

    dwx = jnp.asarray(np.arange(W, dtype=np.int32)[:, None]
                      - np.arange(W, dtype=np.int32)[None, :])
    dwy = jnp.asarray(np.arange(H, dtype=np.int32)[None, :]
                      - np.arange(H, dtype=np.int32)[:, None])

    cost = pl.CostEstimate(
        flops=int(N * C * (2 * H * W * W + 2 * H * H * W)),
        transcendentals=0,
        bytes_accessed=int(2 * N * C * H * W * itemsize + params_flat.size * 4),
    )
    kernel = functools.partial(
        _matmul_kernel, nb=nb, n_total=N, C=C, H=H, W=W, unroll=unroll)

    return pl.pallas_call(
        kernel,
        out_shape=jax.ShapeDtypeStruct((N, C, H, W), x.dtype),
        grid_spec=pltpu.PrefetchScalarGridSpec(
            num_scalar_prefetch=1,
            grid=(grid,),
            in_specs=[
                pl.BlockSpec((W, W), lambda i, p: (0, 0)),
                pl.BlockSpec((H, H), lambda i, p: (0, 0)),
                pl.BlockSpec((nb, C, H, W), lambda i, p: (i, 0, 0, 0)),
            ],
            out_specs=pl.BlockSpec((nb, C, H, W), lambda i, p: (i, 0, 0, 0)),
        ),
        compiler_params=pltpu.CompilerParams(
            dimension_semantics=("parallel",),
            vmem_limit_bytes=vmem_limit,
        ),
        cost_estimate=cost,
    )(params_flat, dwx, dwy, x)


# ---------------------------------------------------------------------------
# Public wrapper (== TranslationTransform.forward)
# ---------------------------------------------------------------------------
def translation_transform(x, params):
    """x: (N, C, H, W), params: (N, 2) -> (N, C, H, W)."""
    N, C, H, W = map(int, x.shape)
    HW = H * W
    itemsize = jnp.dtype(x.dtype).itemsize
    per_example_bytes = C * HW * itemsize

    # Generation-aware VMEM budget (v7x: 64 MiB phys -> ~48 MiB; v5e/v6e: 96 MiB).
    vmem_phys = _tpu_vmem_capacity_bytes()
    vmem_limit = int(max(32 << 20, min(vmem_phys * 3 // 4, 100 << 20)))
    target_block_bytes = int(min(4 << 20, vmem_limit // 8))

    nb = _pick_block_n(N, per_example_bytes, target_block_bytes)
    grid = pl.cdiv(N, nb)
    params_flat = params.reshape(-1).astype(jnp.float32)  # 1-D: no 2-D SMEM pad

    roll_mode = _dynamic_roll_mode()
    if (HW % 128 == 0) and roll_mode != 0:
        unroll = _pick_unroll(nb, C * HW * 4, cap=8)
        try:
            return _run_roll(x, params_flat, nb=nb, grid=grid, unroll=unroll,
                             conv=roll_mode, vmem_limit=vmem_limit)
        except Exception:
            pass   # Mosaic couldn't lower the dynamic-rotate path on this shape.

    unroll = 1 if C >= 8 else _pick_unroll(nb, C * HW * 4, cap=4)
    return _run_matmul(x, params_flat, nb=nb, grid=grid, unroll=unroll,
                       vmem_limit=vmem_limit)


def identity_params(shape):
    """Matches TranslationTransform.identity_params: zeros of shape (N, 2)."""
    return jnp.zeros((shape[0], 2), dtype=jnp.float32)


# ---------------------------------------------------------------------------
# Pure-JAX reference (verification only)
# ---------------------------------------------------------------------------
def _ref_forward(x, params):
    """grid_sample(bilinear, zeros, align_corners=False) with a per-example
    translation grid."""
    N, C, H, W = x.shape
    outs = []
    for n in range(N):
        tx, ty = params[n, 0], params[n, 1]
        xs = jnp.arange(W, dtype=jnp.float32) + tx * W / 2.0
        ys = jnp.arange(H, dtype=jnp.float32) + ty * H / 2.0
        x0 = jnp.floor(xs); fx = xs - x0
        y0 = jnp.floor(ys); fy = ys - y0

        def sample(yy, xx):
            yy_i = yy.astype(jnp.int32)
            xx_i = xx.astype(jnp.int32)
            valid = (((yy_i >= 0) & (yy_i < H))[:, None]
                     & ((xx_i >= 0) & (xx_i < W))[None, :])
            yy_c = jnp.clip(yy_i, 0, H - 1)
            xx_c = jnp.clip(xx_i, 0, W - 1)
            v = x[n][:, yy_c][:, :, xx_c]
            return v * valid[None, :, :]

        out = ((1 - fy)[None, :, None] * (1 - fx)[None, None, :] * sample(y0, x0)
               + (1 - fy)[None, :, None] * fx[None, None, :] * sample(y0, x0 + 1)
               + fy[None, :, None] * (1 - fx)[None, None, :] * sample(y0 + 1, x0)
               + fy[None, :, None] * fx[None, None, :] * sample(y0 + 1, x0 + 1))
        outs.append(out)
    return jnp.stack(outs).astype(x.dtype)


if __name__ == "__main__":
    key = jax.random.PRNGKey(0)
    k_x, k_p, k_x2, k_p2, k_x3, k_p3 = jax.random.split(key, 6)

    # --- primary shape from the module spec: NCHW = (2, 4, 16, 16) -----------
    N, C, H, W = 2, 4, 16, 16
    x = jax.random.normal(k_x, (N, C, H, W), dtype=jnp.float32)

    # 1) identity (zero) params -> output == input
    out_id = jax.block_until_ready(translation_transform(x, identity_params(x.shape)))
    assert jnp.allclose(out_id, x, atol=1e-5), "identity translation mismatch"

    # 2) non-trivial translations vs pure-JAX grid_sample reference
    params = 0.3 * jax.random.normal(k_p, (N, 2), dtype=jnp.float32)
    out = jax.block_until_ready(translation_transform(x, params))
    ref = _ref_forward(x, params)
    assert jnp.allclose(out, ref, atol=3e-4, rtol=3e-4), "translation mismatch"

    # 3) lane-aligned shape with a ragged batch (exercises the cdiv tail)
    x2 = jax.random.normal(k_x2, (5, 3, 8, 16), dtype=jnp.float32)
    params2 = 0.5 * jax.random.normal(k_p2, (5, 2), dtype=jnp.float32)
    out2 = jax.block_until_ready(translation_transform(x2, params2))
    ref2 = _ref_forward(x2, params2)
    assert jnp.allclose(out2, ref2, atol=3e-4, rtol=3e-4), "translation mismatch (tail)"

    # 4) non-lane-aligned spatial shape (exercises the MXU fallback path)
    x3 = jax.random.normal(k_x3, (3, 3, 12, 12), dtype=jnp.float32)
    params3 = 0.4 * jax.random.normal(k_p3, (3, 2), dtype=jnp.float32)
    out3 = jax.block_until_ready(translation_transform(x3, params3))
    ref3 = _ref_forward(x3, params3)
    assert jnp.allclose(out3, ref3, atol=3e-4, rtol=3e-4), "translation mismatch (fallback)"

    print("KERNEL_OK")
</pallas_src>

<mosaic_0001>
module attributes {stable_mosaic.version = 11 : i64} {
  func.func @probe(%arg0: i32, %arg1: memref<1xi32, #tpu.memory_space<smem>>, %arg2: memref<8x256xf32, #tpu.memory_space<vmem>>, %arg3: memref<8x256xf32, #tpu.memory_space<vmem>>) attributes {dimension_semantics = [#tpu.dimension_semantics<arbitrary>], iteration_bounds = array<i64: 1>, scalar_prefetch = 1 : i64, scratch_operands = 0 : i64, tpu.core_type = #tpu.core_type<tc>, window_params = [{pipeline_mode = #tpu.pipeline_mode<synchronous>, transform_indices = @transform_0, window_bounds = array<i64: 8, 256>}, {pipeline_mode = #tpu.pipeline_mode<synchronous>, transform_indices = @transform_1, window_bounds = array<i64: 8, 256>}]} {
    %c0 = arith.constant 0 : index
    %c0_0 = arith.constant 0 : index
    %0 = vector.load %arg2[%c0, %c0_0] : memref<8x256xf32, #tpu.memory_space<vmem>>, vector<8x256xf32>
    %c0_1 = arith.constant 0 : index
    %1 = memref.load %arg1[%c0_1] : memref<1xi32, #tpu.memory_space<smem>>
    %2 = tpu.dynamic_rotate %0 by %1 dim 1 : vector<8x256xf32>, i32 -> vector<8x256xf32>
    %c0_2 = arith.constant 0 : index
    %c0_3 = arith.constant 0 : index
    %3 = vector.load %arg3[%c0_2, %c0_3] : memref<8x256xf32, #tpu.memory_space<vmem>>, vector<8x256xf32>
    tpu.vector_store %arg3[%c0_2, %c0_3], %2 {strides = array<i32>} : memref<8x256xf32, #tpu.memory_space<vmem>>, vector<8x256xf32>,
    return
  }
  func.func @transform_0(%arg0: i32, %arg1: memref<1xi32, #tpu.memory_space<smem>>) -> (i32, i32) {
    %c0_i32 = arith.constant 0 : i32
    %c0_i32_0 = arith.constant 0 : i32
    %c0_i32_1 = arith.constant 0 : i32
    return %c0_i32, %c0_i32_0 : i32, i32
  }
  func.func @transform_1(%arg0: i32, %arg1: memref<1xi32, #tpu.memory_space<smem>>) -> (i32, i32) {
    %c0_i32 = arith.constant 0 : i32
    %c0_i32_0 = arith.constant 0 : i32
    %c0_i32_1 = arith.constant 0 : i32
    return %c0_i32, %c0_i32_0 : i32, i32
  }
}

module attributes {stable_mosaic.version = 11 : i64} {
  func.func @_matmul_kernel(%arg0: i32, %arg1: memref<4xf32, #tpu.memory_space<smem>>, %arg2: memref<16x16xi32, #tpu.memory_space<vmem>>, %arg3: memref<16x16xi32, #tpu.memory_space<vmem>>, %arg4: memref<1x4x16x16xf32, #tpu.memory_space<vmem>>, %arg5: memref<1x4x16x16xf32, #tpu.memory_space<vmem>>) attributes {dimension_semantics = [#tpu.dimension_semantics<parallel>], iteration_bounds = array<i64: 2>, scalar_prefetch = 1 : i64, scratch_operands = 0 : i64, tpu.core_type = #tpu.core_type<tc>, window_params = [{pipeline_mode = #tpu.pipeline_mode<synchronous>, transform_indices = @transform_0, window_bounds = array<i64: 16, 16>}, {pipeline_mode = #tpu.pipeline_mode<synchronous>, transform_indices = @transform_1, window_bounds = array<i64: 16, 16>}, {transform_indices = @transform_2, window_bounds = array<i64: 1, 4, 16, 16>}, {transform_indices = @transform_3, window_bounds = array<i64: 1, 4, 16, 16>}]} {
    %c1_i32 = arith.constant 1 : i32
    %0 = arith.muli %arg0, %c1_i32 : i32
    %c0 = arith.constant 0 : index
    %c0_0 = arith.constant 0 : index
    %1 = vector.load %arg2[%c0, %c0_0] : memref<16x16xi32, #tpu.memory_space<vmem>>, vector<16x16xi32>
    %c0_1 = arith.constant 0 : index
    %c0_2 = arith.constant 0 : index
    %2 = vector.load %arg3[%c0_1, %c0_2] : memref<16x16xi32, #tpu.memory_space<vmem>>, vector<16x16xi32>
    %c0_i32 = arith.constant 0 : i32
    %3 = arith.addi %0, %c0_i32 : i32
    %c2_i32 = arith.constant 2 : i32
    %4 = arith.muli %c2_i32, %3 : i32
    %5 = arith.index_cast %4 : i32 to index
    %6 = memref.load %arg1[%5] : memref<4xf32, #tpu.memory_space<smem>>
    %c2_i32_3 = arith.constant 2 : i32
    %7 = arith.muli %c2_i32_3, %3 : i32
    %c1_i32_4 = arith.constant 1 : i32
    %8 = arith.addi %7, %c1_i32_4 : i32
    %9 = arith.index_cast %8 : i32 to index
    %10 = memref.load %arg1[%9] : memref<4xf32, #tpu.memory_space<smem>>
    %cst = arith.constant 8.000000e+00 : f32
    %11 = arith.mulf %6, %cst : f32
    %cst_5 = arith.constant 8.000000e+00 : f32
    %12 = arith.mulf %10, %cst_5 : f32
    %13 = math.floor %11 : f32
    %14 = math.floor %12 : f32
    %15 = arith.subf %11, %13 : f32
    %16 = arith.subf %12, %14 : f32
    %17 = arith.fptosi %13 : f32 to i32
    %18 = arith.fptosi %14 : f32 to i32
    %19 = vector.broadcast %17 : i32 to vector<16x16xi32>
    %20 = arith.cmpi eq, %1, %19 : vector<16x16xi32>
    %cst_6 = arith.constant 1.000000e+00 : f32
    %21 = arith.subf %cst_6, %15 : f32
    %cst_7 = arith.constant 0.000000e+00 : f32
    %22 = vector.broadcast %21 : f32 to vector<16x16xf32>
    %23 = vector.broadcast %cst_7 : f32 to vector<16x16xf32>
    %24 = arith.select %20, %22, %23 : vector<16x16xi1>, vector<16x16xf32>
    %c1_i32_8 = arith.constant 1 : i32
    %25 = arith.addi %17, %c1_i32_8 : i32
    %26 = vector.broadcast %25 : i32 to vector<16x16xi32>
    %27 = arith.cmpi eq, %1, %26 : vector<16x16xi32>
    %cst_9 = arith.constant 0.000000e+00 : f32
    %28 = vector.broadcast %15 : f32 to vector<16x16xf32>
    %29 = vector.broadcast %cst_9 : f32 to vector<16x16xf32>
    %30 = arith.select %27, %28, %29 : vector<16x16xi1>, vector<16x16xf32>
    %31 = arith.addf %24, %30 : vector<16x16xf32>
    %32 = vector.broadcast %18 : i32 to vector<16x16xi32>
    %33 = arith.cmpi eq, %2, %32 : vector<16x16xi32>
    %cst_10 = arith.constant 1.000000e+00 : f32
    %34 = arith.subf %cst_10, %16 : f32
    %cst_11 = arith.constant 0.000000e+00 : f32
    %35 = vector.broadcast %34 : f32 to vector<16x16xf32>
    %36 = vector.broadcast %cst_11 : f32 to vector<16x16xf32>
    %37 = arith.select %33, %35, %36 : vector<16x16xi1>, vector<16x16xf32>
    %c1_i32_12 = arith.constant 1 : i32
    %38 = arith.addi %18, %c1_i32_12 : i32
    %39 = vector.broadcast %38 : i32 to vector<16x16xi32>
    %40 = arith.cmpi eq, %2, %39 : vector<16x16xi32>
    %cst_13 = arith.constant 0.000000e+00 : f32
    %41 = vector.broadcast %16 : f32 to vector<16x16xf32>
    %42 = vector.broadcast %cst_13 : f32 to vector<16x16xf32>
    %43 = arith.select %40, %41, %42 : vector<16x16xi1>, vector<16x16xf32>
    %44 = arith.addf %37, %43 : vector<16x16xf32>
    %45 = arith.index_cast %c0_i32 : i32 to index
    %c0_14 = arith.constant 0 : index
    %c0_15 = arith.constant 0 : index
    %c0_16 = arith.constant 0 : index
    %46 = vector.load %arg4[%45, %c0_14, %c0_15, %c0_16] : memref<1x4x16x16xf32, #tpu.memory_space<vmem>>, vector<1x1x16x16xf32>
    %47 = vector.shape_cast %46 : vector<1x1x16x16xf32> to vector<16x16xf32>
    %cst_17 = arith.constant dense<0.000000e+00> : vector<16x16xf32>
    %48 = tpu.matmul %47, %31, %cst_17 {dimension_numbers = #tpu.dot_dimension_numbers<[1], [0], [0], [1], [0, 0, 1, 1], [], []>} : vector<16x16xf32>, vector<16x16xf32>, vector<16x16xf32> -> vector<16x16xf32>
    %cst_18 = arith.constant dense<0.000000e+00> : vector<16x16xf32>
    %49 = tpu.matmul %44, %48, %cst_18 {dimension_numbers = #tpu.dot_dimension_numbers<[1], [0], [0], [1], [0, 0, 1, 1], [], []>} : vector<16x16xf32>, vector<16x16xf32>, vector<16x16xf32> -> vector<16x16xf32>
    %50 = arith.index_cast %c0_i32 : i32 to index
    %c0_19 = arith.constant 0 : index
    %c0_20 = arith.constant 0 : index
    %c0_21 = arith.constant 0 : index
    %51 = vector.load %arg5[%50, %c0_19, %c0_20, %c0_21] : memref<1x4x16x16xf32, #tpu.memory_space<vmem>>, vector<1x1x16x16xf32>
    %52 = vector.shape_cast %51 : vector<1x1x16x16xf32> to vector<16x16xf32>
    %53 = vector.shape_cast %49 : vector<16x16xf32> to vector<1x1x16x16xf32>
    tpu.vector_store %arg5[%50, %c0_19, %c0_20, %c0_21], %53 {strides = array<i32>} : memref<1x4x16x16xf32, #tpu.memory_space<vmem>>, vector<1x1x16x16xf32>,
    %54 = arith.index_cast %c0_i32 : i32 to index
    %c1 = arith.constant 1 : index
    %c0_22 = arith.constant 0 : index
    %c0_23 = arith.constant 0 : index
    %55 = vector.load %arg4[%54, %c1, %c0_22, %c0_23] : memref<1x4x16x16xf32, #tpu.memory_space<vmem>>, vector<1x1x16x16xf32>
    %56 = vector.shape_cast %55 : vector<1x1x16x16xf32> to vector<16x16xf32>
    %cst_24 = arith.constant dense<0.000000e+00> : vector<16x16xf32>
    %57 = tpu.matmul %56, %31, %cst_24 {dimension_numbers = #tpu.dot_dimension_numbers<[1], [0], [0], [1], [0, 0, 1, 1], [], []>} : vector<16x16xf32>, vector<16x16xf32>, vector<16x16xf32> -> vector<16x16xf32>
    %cst_25 = arith.constant dense<0.000000e+00> : vector<16x16xf32>
    %58 = tpu.matmul %44, %57, %cst_25 {dimension_numbers = #tpu.dot_dimension_numbers<[1], [0], [0], [1], [0, 0, 1, 1], [], []>} : vector<16x16xf32>, vector<16x16xf32>, vector<16x16xf32> -> vector<16x16xf32>
    %59 = arith.index_cast %c0_i32 : i32 to index
    %c1_26 = arith.constant 1 : index
    %c0_27 = arith.constant 0 : index
    %c0_28 = arith.constant 0 : index
    %60 = vector.load %arg5[%59, %c1_26, %c0_27, %c0_28] : memref<1x4x16x16xf32, #tpu.memory_space<vmem>>, vector<1x1x16x16xf32>
    %61 = vector.shape_cast %60 : vector<1x1x16x16xf32> to vector<16x16xf32>
    %62 = vector.shape_cast %58 : vector<16x16xf32> to vector<1x1x16x16xf32>
    tpu.vector_store %arg5[%59, %c1_26, %c0_27, %c0_28], %62 {strides = array<i32>} : memref<1x4x16x16xf32, #tpu.memory_space<vmem>>, vector<1x1x16x16xf32>,
    %63 = arith.index_cast %c0_i32 : i32 to index
    %c2 = arith.constant 2 : index
    %c0_29 = arith.constant 0 : index
    %c0_30 = arith.constant 0 : index
    %64 = vector.load %arg4[%63, %c2, %c0_29, %c0_30] : memref<1x4x16x16xf32, #tpu.memory_space<vmem>>, vector<1x1x16x16xf32>
    %65 = vector.shape_cast %64 : vector<1x1x16x16xf32> to vector<16x16xf32>
    %cst_31 = arith.constant dense<0.000000e+00> : vector<16x16xf32>
    %66 = tpu.matmul %65, %31, %cst_31 {dimension_numbers = #tpu.dot_dimension_numbers<[1], [0], [0], [1], [0, 0, 1, 1], [], []>} : vector<16x16xf32>, vector<16x16xf32>, vector<16x16xf32> -> vector<16x16xf32>
    %cst_32 = arith.constant dense<0.000000e+00> : vector<16x16xf32>
    %67 = tpu.matmul %44, %66, %cst_32 {dimension_numbers = #tpu.dot_dimension_numbers<[1], [0], [0], [1], [0, 0, 1, 1], [], []>} : vector<16x16xf32>, vector<16x16xf32>, vector<16x16xf32> -> vector<16x16xf32>
    %68 = arith.index_cast %c0_i32 : i32 to index
    %c2_33 = arith.constant 2 : index
    %c0_34 = arith.constant 0 : index
    %c0_35 = arith.constant 0 : index
    %69 = vector.load %arg5[%68, %c2_33, %c0_34, %c0_35] : memref<1x4x16x16xf32, #tpu.memory_space<vmem>>, vector<1x1x16x16xf32>
    %70 = vector.shape_cast %69 : vector<1x1x16x16xf32> to vector<16x16xf32>
    %71 = vector.shape_cast %67 : vector<16x16xf32> to vector<1x1x16x16xf32>
    tpu.vector_store %arg5[%68, %c2_33, %c0_34, %c0_35], %71 {strides = array<i32>} : memref<1x4x16x16xf32, #tpu.memory_space<vmem>>, vector<1x1x16x16xf32>,
    %72 = arith.index_cast %c0_i32 : i32 to index
    %c3 = arith.constant 3 : index
    %c0_36 = arith.constant 0 : index
    %c0_37 = arith.constant 0 : index
    %73 = vector.load %arg4[%72, %c3, %c0_36, %c0_37] : memref<1x4x16x16xf32, #tpu.memory_space<vmem>>, vector<1x1x16x16xf32>
    %74 = vector.shape_cast %73 : vector<1x1x16x16xf32> to vector<16x16xf32>
    %cst_38 = arith.constant dense<0.000000e+00> : vector<16x16xf32>
    %75 = tpu.matmul %74, %31, %cst_38 {dimension_numbers = #tpu.dot_dimension_numbers<[1], [0], [0], [1], [0, 0, 1, 1], [], []>} : vector<16x16xf32>, vector<16x16xf32>, vector<16x16xf32> -> vector<16x16xf32>
    %cst_39 = arith.constant dense<0.000000e+00> : vector<16x16xf32>
    %76 = tpu.matmul %44, %75, %cst_39 {dimension_numbers = #tpu.dot_dimension_numbers<[1], [0], [0], [1], [0, 0, 1, 1], [], []>} : vector<16x16xf32>, vector<16x16xf32>, vector<16x16xf32> -> vector<16x16xf32>
    %77 = arith.index_cast %c0_i32 : i32 to index
    %c3_40 = arith.constant 3 : index
    %c0_41 = arith.constant 0 : index
    %c0_42 = arith.constant 0 : index
    %78 = vector.load %arg5[%77, %c3_40, %c0_41, %c0_42] : memref<1x4x16x16xf32, #tpu.memory_space<vmem>>, vector<1x1x16x16xf32>
    %79 = vector.shape_cast %78 : vector<1x1x16x16xf32> to vector<16x16xf32>
    %80 = vector.shape_cast %76 : vector<16x16xf32> to vector<1x1x16x16xf32>
    tpu.vector_store %arg5[%77, %c3_40, %c0_41, %c0_42], %80 {strides = array<i32>} : memref<1x4x16x16xf32, #tpu.memory_space<vmem>>, vector<1x1x16x16xf32>,
    %c1_i32_43 = arith.constant 1 : i32
    return
  }
  func.func @transform_0(%arg0: i32, %arg1: memref<4xf32, #tpu.memory_space<smem>>) -> (i32, i32) {
    %c0_i32 = arith.constant 0 : i32
    %c0_i32_0 = arith.constant 0 : i32
    %c0_i32_1 = arith.constant 0 : i32
    return %c0_i32, %c0_i32_0 : i32, i32
  }
  func.func @transform_1(%arg0: i32, %arg1: memref<4xf32, #tpu.memory_space<smem>>) -> (i32, i32) {
    %c0_i32 = arith.constant 0 : i32
    %c0_i32_0 = arith.constant 0 : i32
    %c0_i32_1 = arith.constant 0 : i32
    return %c0_i32, %c0_i32_0 : i32, i32
  }
  func.func @transform_2(%arg0: i32, %arg1: memref<4xf32, #tpu.memory_space<smem>>) -> (i32, i32, i32, i32) {
    %c0_i32 = arith.constant 0 : i32
    %c0_i32_0 = arith.constant 0 : i32
    %c0_i32_1 = arith.constant 0 : i32
    %c0_i32_2 = arith.constant 0 : i32
    return %arg0, %c0_i32, %c0_i32_0, %c0_i32_1 : i32, i32, i32, i32
  }
  func.func @transform_3(%arg0: i32, %arg1: memref<4xf32, #tpu.memory_space<smem>>) -> (i32, i32, i32, i32) {
    %c0_i32 = arith.constant 0 : i32
    %c0_i32_0 = arith.constant 0 : i32
    %c0_i32_1 = arith.constant 0 : i32
    %c0_i32_2 = arith.constant 0 : i32
    return %arg0, %c0_i32, %c0_i32_0, %c0_i32_1 : i32, i32, i32, i32
  }
}

</mosaic_0001>

<llo_original>
// kernel: tpu_custom_call.1
$region0: #{tpu_custom_call.1}
  #allocation0 [shape = 'u32[]', space=smem, size = 0x4, offset = 0x4, fixed_abs, tag = 'smem constant byte address 0x4 - core index']
  #allocation1 [shape = 'u32[144,128]{1,0:T(1,128)}', space=vmem, size = 0x12000, scoped, tag = 'internal scratch']
  #allocation2 [shape = 's32[1]{0}', space=sflag, size = 0x4, scoped, tag = 'scoped memory for tpu_custom_call.1']
  #allocation3 [shape = 's32[1]{0:T(128)S(6)}', space=smem, size = 0x200, scoped, tag = 'prefetched SMEM operand 0']
  %s0 = inlined_call_operand.<no memory space> [shape: s32[1], index: 0, kind: input, shape index: {}]
  %s1 = inlined_call_operand.hbm [shape: f32[8,256], index: 1, kind: input, shape index: {}]
  %s2 = inlined_call_operand.hbm [shape: f32[8,256], index: 2, kind: output, shape index: {}]
  %s3 = sld [smem:[#allocation0]]
  $region18: #{tpu_custom_call.1} parent=0
    _
  %s5 = ssub.s32 1, %s3
  %s6 = scalar_select 0, %s5, %s3
  %7 = sst [smem:[#allocation3]] %s0
  $region1: #{tpu_custom_call.1} parent=0
    #allocation4 [shape = 'u8[8192]{0}', space=vmem, size = 0x2000, scoped, tag = 'input window, operand 1, single buffered']
    #allocation5 [shape = 's32[1]{0}', space=sflag, size = 0x4, scoped, tag = 'scoped memory for tpu_custom_call.1']
    #allocation6 [shape = 's32[1]{0}', space=sflag, size = 0x4, scoped, tag = 'scoped memory for tpu_custom_call.1']
    #allocation7 [shape = 'u8[8192]{0}', space=vmem, size = 0x2000, scoped, tag = 'output window, operand 0, single buffered']
    %8 = vsyncpa [#allocation5], 0
    %9 = vsyncpa [#allocation6], 0
    // Predicated region
    $region2: #{tpu_custom_call.1} parent=1 // pred_check
      _
    $region3: #{tpu_custom_call.1} parent=1 // pred_check_branch
      %11 = sbr.rel (0) target = $region5
    $region4: #{tpu_custom_call.1} parent=1 // pred_region
      %s13 = ssub.s32 256, 256
      %14 = vsyncadd [#allocation5], %s13
      %s16 = sshll.u32 [#allocation4], 4
      %s17 = int_to_ptr.vmem [resolvable:$true] %s16
      %19 = dma.hbm_to_vmem [thread:$0]  %s1, 256, %s17, [#allocation5]
    $region5: #{tpu_custom_call.1} parent=1 // pred_fallthru
      _
    // Predicated region
    $region6: #{tpu_custom_call.1} parent=1 // pred_check
      _
    $region7: #{tpu_custom_call.1} parent=1 // pred_check_branch
      %21 = sbr.rel (0) target = $region9
    $region8: #{tpu_custom_call.1} parent=1 // pred_region
      %22 = dma.done [#allocation5], 256
    $region9: #{tpu_custom_call.1} parent=1 // pred_fallthru
      _
    %v23 = vld [vmem:[#allocation4] sm:$0xff]
    %v24 = vld [vmem:[#allocation4 + $0x8] sm:$0xff]
    %s25 = sld [smem:[#allocation3]]
    %s26 = sand.u32 %s25, 255
    %s27 = sand.u32 %s26, 127
    %s28 = sshrl.u32 %s26, 7
    %29 = vrot.lane.b32.xlu0 %v23, %s27
    %v30 = vpop.permute.xlu0 %29
    %31 = vrot.lane.b32.xlu0 %v24, %s27
    %v32 = vpop.permute.xlu0 %31
    %v33 = vstv %s27
    %v34 = vlaneseq
    %v35 = vand.u32 %v34, 127
    %vm36 = vcmp.lt.s32.totalorder %v35, %v33
    %v37 = vsel %vm36, %v30, %v32
    %v38 = vsel %vm36, %v32, %v30
    %s39 = sand.u32 %s28, 1
    %v40 = vstv %s39
    %vm41 = vcmp.ne.s32.totalorder %v40, 0
    %v42 = vsel %vm41, %v37, %v38
    %v43 = vsel %vm41, %v38, %v37
    %44 = vst [vmem:[#allocation7] sm:$0xff] %v42
    %45 = vst [vmem:[#allocation7 + $0x8] sm:$0xff] %v43
    // Predicated region
    $region10: #{tpu_custom_call.1} parent=1 // pred_check
      _
    $region11: #{tpu_custom_call.1} parent=1 // pred_check_branch
      %47 = sbr.rel (0) target = $region13
    $region12: #{tpu_custom_call.1} parent=1 // pred_region
      %s49 = ssub.s32 256, 256
      %50 = vsyncadd [#allocation6], %s49
      %s52 = sshll.u32 [#allocation7], 4
      %s53 = int_to_ptr.vmem [resolvable:$true] %s52
      %55 = dma.vmem_to_hbm [thread:$0]  %s53, 256, %s2, [#allocation6]
    $region13: #{tpu_custom_call.1} parent=1 // pred_fallthru
      _
    // Predicated region
    $region14: #{tpu_custom_call.1} parent=1 // pred_check
      _
    $region15: #{tpu_custom_call.1} parent=1 // pred_check_branch
      %57 = sbr.rel (0) target = $region17
    $region16: #{tpu_custom_call.1} parent=1 // pred_region
      %58 = dma.done [#allocation6], 256
    $region17: #{tpu_custom_call.1} parent=1 // pred_fallthru
      _
    %59 = vsyncpa [#allocation5], 1
    %60 = vsyncpa [#allocation6], 1

// kernel: tpu_custom_call.1
$region0: #{tpu_custom_call.1}
  #allocation0 [shape = 'u32[]', space=smem, size = 0x4, offset = 0x4, fixed_abs, tag = 'smem constant byte address 0x4 - core index']
  #allocation1 [shape = 'u32[144,128]{1,0:T(1,128)}', space=vmem, size = 0x12000, scoped, tag = 'internal scratch']
  #allocation2 [shape = 's32[1]{0}', space=sflag, size = 0x4, scoped, tag = 'scoped memory for tpu_custom_call.1']
  #allocation3 [shape = 'u8[512]{0}', space=smem, size = 0x200, scoped, tag = 'prefetched SMEM operand 0']
  %s0 = inlined_call_operand.hbm [shape: f32[4], index: 0, kind: input, shape index: {}]
  %s1 = inlined_call_operand.hbm [shape: s32[16,16], index: 1, kind: input, shape index: {}]
  %s2 = inlined_call_operand.hbm [shape: s32[16,16], index: 2, kind: input, shape index: {}]
  %s3 = inlined_call_operand.hbm [shape: f32[2,4,16,16], index: 3, kind: input, shape index: {}]
  %s4 = inlined_call_operand.hbm [shape: f32[2,4,16,16], index: 4, kind: output, shape index: {}]
  %s5 = sld [smem:[#allocation0]]
  $region57: #{tpu_custom_call.1} parent=0
    _
  %s7 = ssub.s32 1, %s5
  %s8 = scalar_select 0, %s7, %s5
  %10 = dma.hbm_to_smem %s0, 16, [#allocation3], [#allocation2]
  %11 = dma.done [#allocation2], 16
  %12 = sfence
  $region1: #{tpu_custom_call.1} parent=0
    #allocation4 [shape = 'u8[8192]{0}', space=vmem, size = 0x2000, scoped, tag = 'input window, operand 1, single buffered']
    #allocation5 [shape = 's32[2]{0}', space=sflag, size = 0x8, scoped, tag = 'scoped memory for tpu_custom_call.1']
    #allocation6 [shape = 's32[2]{0}', space=sflag, size = 0x8, scoped, tag = 'scoped memory for tpu_custom_call.1']
    #allocation7 [shape = 'u8[8192]{0}', space=vmem, size = 0x2000, scoped, tag = 'input window, operand 2, single buffered']
    #allocation8 [shape = 's32[1]{0}', space=sflag, size = 0x4, scoped, tag = 'scoped memory for tpu_custom_call.1']
    #allocation9 [shape = 'u8[65536]{0}', space=vmem, size = 0x10000, scoped, tag = 'input window, operand 3']
    #allocation10 [shape = 'u8[65536]{0}', space=vmem, size = 0x10000, scoped, tag = 'output window, operand 0']
    %13 = vsyncpa [#allocation5], 0
    %14 = vsyncpa [#allocation8], 0
    %15 = vsyncpa [#allocation6], 0
    %s16 = scalar_lea.sflag [#allocation6], 1
    %17 = vsyncpa %s16, 0
    loop: start=0, step=1, limit=4
    $region2: #{tpu_custom_call.1} parent=1 // loop_pre_header
      _
    $region3: #{tpu_custom_call.1} parent=1 // loop_header
      %s19 = sphi 0, %s23
      %p20 = scmp.ge.s32.totalorder %s19, 4
      %s27 = sphi 0, %s27
      %s29 = sphi 0, %s27
      %s30 = sphi 0, %s29
      %s44 = sphi 0, %s30
      %s48 = sphi 0, %s48
      %s50 = sphi 0, %s48
      %s51 = sphi 0, %s50
      %s65 = sphi 0, %s51
      %s71 = sphi 0, %s73
      %s74 = sphi 0, %s71
      %s75 = sphi 0, %s74
      %s91 = sphi 0, %s75
      %s97 = sphi 0, %s99
      %s100 = sphi 0, %s97
      %s101 = sphi 0, %s100
      %s117 = sphi 0, %s101
    $region4: #{tpu_custom_call.1} parent=1 // loop_header_branch
      %22 = sbr.rel (%p20) target = $region8
    $region5: #{tpu_custom_call.1} parent=1 // loop_body
      %s24 = ssub.s32 %s19, 1
      %s25 = ssub.s32 %s19, 2
      %s26 = sadd.s32 %s19, 1
      %s28 = sadd.s32 %s27, 1
      %p31 = scmp.eq.s32.totalorder %s19, 1
      %p32 = scmp.ne.s32.totalorder %s27, %s29
      %p33 = scmp.eq.s32.totalorder %s19, 0
      %p34 = por %p32, %p33
      %p35 = scmp.ne.s32.totalorder %s27, %s29
      %p36 = scmp.eq.s32.totalorder %s24, 1
      %p37 = por %p35, %p36
      %p38 = scmp.ne.s32.totalorder %s29, %s30
      %p39 = scmp.eq.s32.totalorder %s24, 0
      %p40 = por %p38, %p39
      %p41 = scmp.ne.s32.totalorder %s29, %s30
      %p42 = scmp.eq.s32.totalorder %s25, 1
      %p43 = por %p41, %p42
      %p45 = scmp.ne.s32.totalorder %s30, %s44
      %p46 = scmp.eq.s32.totalorder %s25, 0
      %p47 = por %p45, %p46
      %s49 = sadd.s32 %s48, 1
      %p52 = scmp.eq.s32.totalorder %s19, 1
      %p53 = scmp.ne.s32.totalorder %s48, %s50
      %p54 = scmp.eq.s32.totalorder %s19, 0
      %p55 = por %p53, %p54
      %p56 = scmp.ne.s32.totalorder %s48, %s50
      %p57 = scmp.eq.s32.totalorder %s24, 1
      %p58 = por %p56, %p57
      %p59 = scmp.ne.s32.totalorder %s50, %s51
      %p60 = scmp.eq.s32.totalorder %s24, 0
      %p61 = por %p59, %p60
      %p62 = scmp.ne.s32.totalorder %s50, %s51
      %p63 = scmp.eq.s32.totalorder %s25, 1
      %p64 = por %p62, %p63
      %p66 = scmp.ne.s32.totalorder %s51, %s65
      %p67 = scmp.eq.s32.totalorder %s25, 0
      %p68 = por %p66, %p67
      %s69 = ssub.s32 %s19, %s26
      %p70 = scmp.eq.s32.totalorder %s69, 0
      %s72 = sadd.s32 %s71, 1
      %s73 = scalar_select %p70, %s71, %s72
      %p76 = pneg %p70
      %p77 = scmp.eq.s32.totalorder %s19, 1
      %p78 = por %p76, %p77
      %p79 = scmp.ne.s32.totalorder %s71, %s74
      %p80 = scmp.eq.s32.totalorder %s19, 0
      %p81 = por %p79, %p80
      %p82 = scmp.ne.s32.totalorder %s71, %s74
      %p83 = scmp.eq.s32.totalorder %s24, 1
      %p84 = por %p82, %p83
      %p85 = scmp.ne.s32.totalorder %s74, %s75
      %p86 = scmp.eq.s32.totalorder %s24, 0
      %p87 = por %p85, %p86
      %p88 = scmp.ne.s32.totalorder %s74, %s75
      %p89 = scmp.eq.s32.totalorder %s25, 1
      %p90 = por %p88, %p89
      %p92 = scmp.ne.s32.totalorder %s75, %s91
      %p93 = scmp.eq.s32.totalorder %s25, 0
      %p94 = por %p92, %p93
      %s95 = ssub.s32 %s19, %s26
      %p96 = scmp.eq.s32.totalorder %s95, 0
      %s98 = sadd.s32 %s97, 1
      %s99 = scalar_select %p96, %s97, %s98
      %p102 = pneg %p96
      %p103 = scmp.eq.s32.totalorder %s19, 1
      %p104 = por %p102, %p103
      %p105 = scmp.ne.s32.totalorder %s97, %s100
      %p106 = scmp.eq.s32.totalorder %s19, 0
      %p107 = por %p105, %p106
      %p108 = scmp.ne.s32.totalorder %s97, %s100
      %p109 = scmp.eq.s32.totalorder %s24, 1
      %p110 = por %p108, %p109
      %p111 = scmp.ne.s32.totalorder %s100, %s101
      %p112 = scmp.eq.s32.totalorder %s24, 0
      %p113 = por %p111, %p112
      %p114 = scmp.ne.s32.totalorder %s100, %s101
      %p115 = scmp.eq.s32.totalorder %s25, 1
      %p116 = por %p114, %p115
      %p118 = scmp.ne.s32.totalorder %s101, %s117
      %p119 = scmp.eq.s32.totalorder %s25, 0
      %p120 = por %p118, %p119
      %p121 = scmp.le.s32.totalorder 1, %s19
      %p122 = scmp.lt.s32.totalorder %s19, 3
      %p123 = pnand %p121, %p122
      %p124 = pneg %p123
      // Predicated region
      $region9: #{tpu_custom_call.1} parent=5 // pred_check
        _
      $region10: #{tpu_custom_call.1} parent=5 // pred_check_branch
        %126 = sbr.rel (%p123) target = $region12
      $region11: #{tpu_custom_call.1} parent=5 // pred_region
        %s127 = ssub.s32 %s19, 1
        // Predicated region
        $region13: #{tpu_custom_call.1} parent=11 // pred_check
          %p128 = pneg %p40
        $region14: #{tpu_custom_call.1} parent=11 // pred_check_branch
          %130 = sbr.rel (%p128) target = $region16
        $region15: #{tpu_custom_call.1} parent=11 // pred_region
          %s132 = ssub.s32 256, 256
          %133 = vsyncadd [#allocation5], %s132
          %s134 = sshll.u32 [#allocation4], 4
          %s135 = int_to_ptr.vmem [resolvable:$true] %s134
          %140 = dma.hbm_to_vmem [thread:$0]  %s1, 256, %s135, [#allocation5], 128, 128, 8
        $region16: #{tpu_custom_call.1} parent=11 // pred_fallthru
          _
        // Predicated region
        $region17: #{tpu_custom_call.1} parent=11 // pred_check
          %p141 = pneg %p61
        $region18: #{tpu_custom_call.1} parent=11 // pred_check_branch
          %143 = sbr.rel (%p141) target = $region20
        $region19: #{tpu_custom_call.1} parent=11 // pred_region
          %s145 = ssub.s32 256, 256
          %146 = vsyncadd [#allocation8], %s145
          %s147 = sshll.u32 [#allocation7], 4
          %s148 = int_to_ptr.vmem [resolvable:$true] %s147
          %153 = dma.hbm_to_vmem [thread:$0]  %s2, 256, %s148, [#allocation8], 128, 128, 8
        $region20: #{tpu_custom_call.1} parent=11 // pred_fallthru
          _
      $region12: #{tpu_custom_call.1} parent=5 // pred_fallthru
        _
      %p154 = scmp.lt.s32.totalorder %s19, 2
      // Predicated region
      $region21: #{tpu_custom_call.1} parent=5 // pred_check
        %p155 = pneg %p154
      $region22: #{tpu_custom_call.1} parent=5 // pred_check_branch
        %157 = sbr.rel (%p155) target = $region24
      $region23: #{tpu_custom_call.1} parent=5 // pred_region
        // Predicated region
        $region25: #{tpu_custom_call.1} parent=23 // pred_check
          %p158 = pneg %p81
        $region26: #{tpu_custom_call.1} parent=23 // pred_check_branch
          %160 = sbr.rel (%p158) target = $region28
        $region27: #{tpu_custom_call.1} parent=23 // pred_region
          %s161 = sand.u32 %s19, 1
          %s162 = scalar_lea.sflag [#allocation5], %s161
          %s163 = sand.u32 %s71, 1
          %s164 = smul.addr %s163, 64
          %s165 = scalar_lea.vmem [#allocation9], %s164
          %s167 = ssub.s32 1024, 1024
          %168 = vsyncadd %s162, %s167
          %s169 = smul.addr %s19, 8
          %s170 = smul.addr %s169, 128
          %s171 = scalar_lea.hbm %s3, %s170
          %s172 = sshll.u32 %s165, 4
          %s173 = int_to_ptr.vmem [resolvable:$true] %s172
          %178 = dma.hbm_to_vmem [thread:$0]  %s171, 1024, %s173, %s162, 128, 128, 8
        $region28: #{tpu_custom_call.1} parent=23 // pred_fallthru
          _
      $region24: #{tpu_custom_call.1} parent=5 // pred_fallthru
        _
      %p179 = scmp.le.s32.totalorder 1, %s19
      %p180 = scmp.lt.s32.totalorder %s19, 3
      %p181 = pnand %p179, %p180
      %p182 = pneg %p181
      // Predicated region
      $region29: #{tpu_custom_call.1} parent=5 // pred_check
        _
      $region30: #{tpu_custom_call.1} parent=5 // pred_check_branch
        %184 = sbr.rel (%p181) target = $region32
      $region31: #{tpu_custom_call.1} parent=5 // pred_region
        %s185 = ssub.s32 %s19, 1
        // Predicated region
        $region33: #{tpu_custom_call.1} parent=31 // pred_check
          %p186 = pneg %p40
        $region34: #{tpu_custom_call.1} parent=31 // pred_check_branch
          %188 = sbr.rel (%p186) target = $region36
        $region35: #{tpu_custom_call.1} parent=31 // pred_region
          %189 = dma.done [#allocation5], 256
        $region36: #{tpu_custom_call.1} parent=31 // pred_fallthru
          _
        // Predicated region
        $region37: #{tpu_custom_call.1} parent=31 // pred_check
          %p190 = pneg %p61
        $region38: #{tpu_custom_call.1} parent=31 // pred_check_branch
          %192 = sbr.rel (%p190) target = $region40
        $region39: #{tpu_custom_call.1} parent=31 // pred_region
          %193 = dma.done [#allocation8], 256
        $region40: #{tpu_custom_call.1} parent=31 // pred_fallthru
          _
        %s194 = sand.u32 %s24, 1
        %s195 = scalar_lea.sflag [#allocation5], %s194
        %s196 = sand.u32 %s74, 1
        %s197 = smul.addr %s196, 64
        %s198 = scalar_lea.vmem [#allocation9], %s197
        // Predicated region
        $region41: #{tpu_custom_call.1} parent=31 // pred_check
          %p199 = pneg %p87
        $region42: #{tpu_custom_call.1} parent=31 // pred_check_branch
          %201 = sbr.rel (%p199) target = $region44
        $region43: #{tpu_custom_call.1} parent=31 // pred_region
          %202 = dma.done %s195, 1024
        $region44: #{tpu_custom_call.1} parent=31 // pred_fallthru
          _
        %p203 = pneg %p40
        %p204 = pneg %p37
        %p205 = pneg %p61
        %p206 = pneg %p58
        %s207 = sand.u32 %s24, 1
        %s208 = scalar_lea.sflag [#allocation5], %s207
        %s209 = sand.u32 %s74, 1
        %s210 = smul.addr %s209, 64
        %s211 = scalar_lea.vmem [#allocation9], %s210
        %p212 = pneg %p87
        %p213 = pneg %p84
        %p214 = pneg %p113
        %p215 = pneg %p110
        %s216 = sand.u32 %s100, 1
        %s217 = scalar_lea.sflag [#allocation6], %s216
        %s218 = sand.u32 %s100, 1
        %s219 = smul.addr %s218, 64
        %s220 = scalar_lea.vmem [#allocation10], %s219
        %v221 = vld [vmem:[#allocation4] sm:$0xff]
        %v222 = vld [vmem:[#allocation4 + $0x8] sm:$0xff]
        %v223 = vld [vmem:[#allocation7] sm:$0xff]
        %v224 = vld [vmem:[#allocation7 + $0x8] sm:$0xff]
        %s225 = smul.u32 %s24, 2
        %s226 = sld [smem:[#allocation3 + %s225]]
        %s227 = sadd.s32 %s225, 1
        %s228 = sld [smem:[#allocation3 + %s227]]
        %s229 = smul.f32 %s226, 8.0
        %s230 = smul.f32 %s228, 8.0
        %s231 = sfloor.f32 %s229
        %s232 = sfloor.f32 %s230
        %s233 = ssub.f32 %s229, %s231
        %s234 = ssub.f32 %s230, %s232
        %s235 = scvt.f32.s32.to.zero.pseudo %s231
        %s236 = scvt.f32.s32.to.zero.pseudo %s232
        %v237 = vstv %s235
        %vm238 = vcmp.eq.s32.totalorder %v221, %v237
        %vm239 = vcmp.eq.s32.totalorder %v222, %v237
        %s240 = ssub.f32 1.0, %s233
        %v241 = vstv %s240
        %v242 = vsel %vm238, %v241, 0.0
        %v243 = vsel %vm239, %v241, 0.0
        %s244 = sadd.s32 %s235, 1
        %v245 = vstv %s244
        %vm246 = vcmp.eq.s32.totalorder %v221, %v245
        %vm247 = vcmp.eq.s32.totalorder %v222, %v245
        %v248 = vstv %s233
        %v249 = vsel %vm246, %v248, 0.0
        %v250 = vsel %vm247, %v248, 0.0
        %v251 = vadd.f32 %v242, %v249
        %v252 = vadd.f32 %v243, %v250
        %v253 = vstv %s236
        %vm254 = vcmp.eq.s32.totalorder %v223, %v253
        %vm255 = vcmp.eq.s32.totalorder %v224, %v253
        %s256 = ssub.f32 1.0, %s234
        %v257 = vstv %s256
        %v258 = vsel %vm254, %v257, 0.0
        %v259 = vsel %vm255, %v257, 0.0
        %s260 = sadd.s32 %s236, 1
        %v261 = vstv %s260
        %vm262 = vcmp.eq.s32.totalorder %v223, %v261
        %vm263 = vcmp.eq.s32.totalorder %v224, %v261
        %v264 = vstv %s234
        %v265 = vsel %vm262, %v264, 0.0
        %v266 = vsel %vm263, %v264, 0.0
        %v267 = vadd.f32 %v258, %v265
        %v268 = vadd.f32 %v259, %v266
        %v269 = vld [vmem:[%s198] sm:$0xff]
        %v270 = vld [vmem:[%s198 + $0x8] sm:$0xff]
        %vm271 = vcmask 130048
        %v273 = vsel %vm271, %v269, 0
        %v276 = vsel %vm271, %v270, 0
        %278 = vmatprep.subr.mxu0 0.0
        %279 = vmatpush1.msra.mxu0 %v251
        %280 = vmatprep.subr.mxu0 0.0
        %281 = vmatpush1.msra.mxu0 %v252
        %282 = vmatprep.subr.mxu0 0.0
        %283 = vmatpush1.msra.mxu0 0.0
        %284 = vmatprep.subr.mxu0 0.0
        %285 = vmatpush1.msra.mxu0 0.0
        %286 = vmatprep.subr.mxu0 0.0
        %287 = vmatpush1.msra.mxu0 0.0
        %288 = vmatprep.subr.mxu0 0.0
        %289 = vmatpush1.msra.mxu0 0.0
        %290 = vmatprep.subr.mxu0 0.0
        %291 = vmatpush1.msra.mxu0 0.0
        %292 = vmatprep.subr.mxu0 0.0
        %293 = vmatpush1.msra.mxu0 0.0
        %294 = vmatprep.subr.mxu0 0.0
        %295 = vmatpush1.msra.mxu0 0.0
        %296 = vmatprep.subr.mxu0 0.0
        %297 = vmatpush1.msra.mxu0 0.0
        %298 = vmatprep.subr.mxu0 0.0
        %299 = vmatpush1.msra.mxu0 0.0
        %300 = vmatprep.subr.mxu0 0.0
        %301 = vmatpush1.msra.mxu0 0.0
        %302 = vmatprep.subr.mxu0 0.0
        %303 = vmatpush1.msra.mxu0 0.0
        %304 = vmatprep.subr.mxu0 0.0
        %305 = vmatpush1.msra.mxu0 0.0
        %306 = vmatprep.subr.mxu0 0.0
        %307 = vmatpush1.msra.mxu0 0.0
        %308 = vmatprep.subr.mxu0 0.0
        %309 = vmatpush1.msra.mxu0 0.0
        %310 = vmatprep.subr.mxu0 0.0
        %311 = vmatpush1.msra.mxu0 0.0
        %312 = vmatprep.subr.mxu0 0.0
        %313 = vmatpush1.msra.mxu0 0.0
        %314 = vmatprep.subr.mxu0 0.0
        %315 = vmatpush1.msra.mxu0 0.0
        %316 = vmatprep.subr.mxu0 0.0
        %317 = vmatpush1.msra.mxu0 0.0
        %318 = vmatprep.subr.mxu0 0.0
        %319 = vmatpush1.msra.mxu0 0.0
        %320 = vmatprep.subr.mxu0 0.0
        %321 = vmatpush1.msra.mxu0 0.0
        %322 = vmatprep.subr.mxu0 0.0
        %323 = vmatpush1.msra.mxu0 0.0
        %324 = vmatprep.subr.mxu0 0.0
        %325 = vmatpush1.msra.mxu0 0.0
        %326 = vmatprep.subr.mxu0 0.0
        %327 = vmatpush1.msra.mxu0 0.0
        %328 = vmatprep.subr.mxu0 0.0
        %329 = vmatpush1.msra.mxu0 0.0
        %330 = vmatprep.subr.mxu0 0.0
        %331 = vmatpush1.msra.mxu0 0.0
        %332 = vmatprep.subr.mxu0 0.0
        %333 = vmatpush1.msra.mxu0 0.0
        %334 = vmatprep.subr.mxu0 0.0
        %335 = vmatpush1.msra.mxu0 0.0
        %336 = vmatprep.subr.mxu0 0.0
        %337 = vmatpush1.msra.mxu0 0.0
        %338 = vmatprep.subr.mxu0 0.0
        %339 = vmatpush1.msra.mxu0 0.0
        %340 = vmatprep.subr.mxu0 0.0
        %341 = vmatpush1.msra.mxu0 0.0
        %342 = vmatprep.mubr.f32.mxu0 0.0
        %343 = vmatmul.mubr.f32.gmra.mrb[0].mxu0 %v273
        %v344 = vpop.f32.mrb[0].mxu0
        %v345 = vadd.f32 0.0, %v344
        %v346 = vpop.f32.mrb[0].mxu0
        %347 = vmatprep.mubr.f32.mxu0 0.0
        %348 = vmatmul.mubr.f32.gmra.mrb[0].mxu0 %v276
        %v349 = vpop.f32.mrb[0].mxu0
        %v350 = vadd.f32 0.0, %v349
        %v351 = vpop.f32.mrb[0].mxu0
        %352 = vdwg.mxu0
        %v354 = vsel %vm271, %v267, 0
        %v357 = vsel %vm271, %v268, 0
        %359 = vmatprep.subr.mxu0 0.0
        %360 = vmatpush1.msra.mxu0 %v345
        %361 = vmatprep.subr.mxu0 0.0
        %362 = vmatpush1.msra.mxu0 %v350
        %363 = vmatprep.subr.mxu0 0.0
        %364 = vmatpush1.msra.mxu0 0.0
        %365 = vmatprep.subr.mxu0 0.0
        %366 = vmatpush1.msra.mxu0 0.0
        %367 = vmatprep.subr.mxu0 0.0
        %368 = vmatpush1.msra.mxu0 0.0
        %369 = vmatprep.subr.mxu0 0.0
        %370 = vmatpush1.msra.mxu0 0.0
        %371 = vmatprep.subr.mxu0 0.0
        %372 = vmatpush1.msra.mxu0 0.0
        %373 = vmatprep.subr.mxu0 0.0
        %374 = vmatpush1.msra.mxu0 0.0
        %375 = vmatprep.subr.mxu0 0.0
        %376 = vmatpush1.msra.mxu0 0.0
        %377 = vmatprep.subr.mxu0 0.0
        %378 = vmatpush1.msra.mxu0 0.0
        %379 = vmatprep.subr.mxu0 0.0
        %380 = vmatpush1.msra.mxu0 0.0
        %381 = vmatprep.subr.mxu0 0.0
        %382 = vmatpush1.msra.mxu0 0.0
        %383 = vmatprep.subr.mxu0 0.0
        %384 = vmatpush1.msra.mxu0 0.0
        %385 = vmatprep.subr.mxu0 0.0
        %386 = vmatpush1.msra.mxu0 0.0
        %387 = vmatprep.subr.mxu0 0.0
        %388 = vmatpush1.msra.mxu0 0.0
        %389 = vmatprep.subr.mxu0 0.0
        %390 = vmatpush1.msra.mxu0 0.0
        %391 = vmatprep.subr.mxu0 0.0
        %392 = vmatpush1.msra.mxu0 0.0
        %393 = vmatprep.subr.mxu0 0.0
        %394 = vmatpush1.msra.mxu0 0.0
        %395 = vmatprep.subr.mxu0 0.0
        %396 = vmatpush1.msra.mxu0 0.0
        %397 = vmatprep.subr.mxu0 0.0
        %398 = vmatpush1.msra.mxu0 0.0
        %399 = vmatprep.subr.mxu0 0.0
        %400 = vmatpush1.msra.mxu0 0.0
        %401 = vmatprep.subr.mxu0 0.0
        %402 = vmatpush1.msra.mxu0 0.0
        %403 = vmatprep.subr.mxu0 0.0
        %404 = vmatpush1.msra.mxu0 0.0
        %405 = vmatprep.subr.mxu0 0.0
        %406 = vmatpush1.msra.mxu0 0.0
        %407 = vmatprep.subr.mxu0 0.0
        %408 = vmatpush1.msra.mxu0 0.0
        %409 = vmatprep.subr.mxu0 0.0
        %410 = vmatpush1.msra.mxu0 0.0
        %411 = vmatprep.subr.mxu0 0.0
        %412 = vmatpush1.msra.mxu0 0.0
        %413 = vmatprep.subr.mxu0 0.0
        %414 = vmatpush1.msra.mxu0 0.0
        %415 = vmatprep.subr.mxu0 0.0
        %416 = vmatpush1.msra.mxu0 0.0
        %417 = vmatprep.subr.mxu0 0.0
        %418 = vmatpush1.msra.mxu0 0.0
        %419 = vmatprep.subr.mxu0 0.0
        %420 = vmatpush1.msra.mxu0 0.0
        %421 = vmatprep.subr.mxu0 0.0
        %422 = vmatpush1.msra.mxu0 0.0
        %423 = vmatprep.mubr.f32.mxu0 0.0
        %424 = vmatmul.mubr.f32.gmra.mrb[0].mxu0 %v354
        %v425 = vpop.f32.mrb[0].mxu0
        %v426 = vadd.f32 0.0, %v425
        %v427 = vpop.f32.mrb[0].mxu0
        %428 = vmatprep.mubr.f32.mxu0 0.0
        %429 = vmatmul.mubr.f32.gmra.mrb[0].mxu0 %v357
        %v430 = vpop.f32.mrb[0].mxu0
        %v431 = vadd.f32 0.0, %v430
        %v432 = vpop.f32.mrb[0].mxu0
        %433 = vdwg.mxu0
        %434 = vst.msk [vmem:[%s220] sm:$0xff] %vm271, %v426
        %435 = vst.msk [vmem:[%s220 + $0x8] sm:$0xff] %vm271, %v431
        %s436 = scalar_lea.vmem %s198, 16 [#allocation9]
        %v437 = vld [vmem:[%s436] sm:$0xff]
        %v438 = vld [vmem:[%s436 + $0x8] sm:$0xff]
        %v440 = vsel %vm271, %v437, 0
        %v443 = vsel %vm271, %v438, 0
        %445 = vmatprep.subr.mxu0 0.0
        %446 = vmatpush1.msra.mxu0 %v251
        %447 = vmatprep.subr.mxu0 0.0
        %448 = vmatpush1.msra.mxu0 %v252
        %449 = vmatprep.subr.mxu0 0.0
        %450 = vmatpush1.msra.mxu0 0.0
        %451 = vmatprep.subr.mxu0 0.0
        %452 = vmatpush1.msra.mxu0 0.0
        %453 = vmatprep.subr.mxu0 0.0
        %454 = vmatpush1.msra.mxu0 0.0
        %455 = vmatprep.subr.mxu0 0.0
        %456 = vmatpush1.msra.mxu0 0.0
        %457 = vmatprep.subr.mxu0 0.0
        %458 = vmatpush1.msra.mxu0 0.0
        %459 = vmatprep.subr.mxu0 0.0
        %460 = vmatpush1.msra.mxu0 0.0
        %461 = vmatprep.subr.mxu0 0.0
        %462 = vmatpush1.msra.mxu0 0.0
        %463 = vmatprep.subr.mxu0 0.0
        %464 = vmatpush1.msra.mxu0 0.0
        %465 = vmatprep.subr.mxu0 0.0
        %466 = vmatpush1.msra.mxu0 0.0
        %467 = vmatprep.subr.mxu0 0.0
        %468 = vmatpush1.msra.mxu0 0.0
        %469 = vmatprep.subr.mxu0 0.0
        %470 = vmatpush1.msra.mxu0 0.0
        %471 = vmatprep.subr.mxu0 0.0
        %472 = vmatpush1.msra.mxu0 0.0
        %473 = vmatprep.subr.mxu0 0.0
        %474 = vmatpush1.msra.mxu0 0.0
        %475 = vmatprep.subr.mxu0 0.0
        %476 = vmatpush1.msra.mxu0 0.0
        %477 = vmatprep.subr.mxu0 0.0
        %478 = vmatpush1.msra.mxu0 0.0
        %479 = vmatprep.subr.mxu0 0.0
        %480 = vmatpush1.msra.mxu0 0.0
        %481 = vmatprep.subr.mxu0 0.0
        %482 = vmatpush1.msra.mxu0 0.0
        %483 = vmatprep.subr.mxu0 0.0
        %484 = vmatpush1.msra.mxu0 0.0
        %485 = vmatprep.subr.mxu0 0.0
        %486 = vmatpush1.msra.mxu0 0.0
        %487 = vmatprep.subr.mxu0 0.0
        %488 = vmatpush1.msra.mxu0 0.0
        %489 = vmatprep.subr.mxu0 0.0
        %490 = vmatpush1.msra.mxu0 0.0
        %491 = vmatprep.subr.mxu0 0.0
        %492 = vmatpush1.msra.mxu0 0.0
        %493 = vmatprep.subr.mxu0 0.0
        %494 = vmatpush1.msra.mxu0 0.0
        %495 = vmatprep.subr.mxu0 0.0
        %496 = vmatpush1.msra.mxu0 0.0
        %497 = vmatprep.subr.mxu0 0.0
        %498 = vmatpush1.msra.mxu0 0.0
        %499 = vmatprep.subr.mxu0 0.0
        %500 = vmatpush1.msra.mxu0 0.0
        %501 = vmatprep.subr.mxu0 0.0
        %502 = vmatpush1.msra.mxu0 0.0
        %503 = vmatprep.subr.mxu0 0.0
        %504 = vmatpush1.msra.mxu0 0.0
        %505 = vmatprep.subr.mxu0 0.0
        %506 = vmatpush1.msra.mxu0 0.0
        %507 = vmatprep.subr.mxu0 0.0
        %508 = vmatpush1.msra.mxu0 0.0
        %509 = vmatprep.mubr.f32.mxu0 0.0
        %510 = vmatmul.mubr.f32.gmra.mrb[0].mxu0 %v440
        %v511 = vpop.f32.mrb[0].mxu0
        %v512 = vadd.f32 0.0, %v511
        %v513 = vpop.f32.mrb[0].mxu0
        %514 = vmatprep.mubr.f32.mxu0 0.0
        %515 = vmatmul.mubr.f32.gmra.mrb[0].mxu0 %v443
        %v516 = vpop.f32.mrb[0].mxu0
        %v517 = vadd.f32 0.0, %v516
        %v518 = vpop.f32.mrb[0].mxu0
        %519 = vdwg.mxu0
        %520 = vmatprep.subr.mxu0 0.0
        %521 = vmatpush1.msra.mxu0 %v512
        %522 = vmatprep.subr.mxu0 0.0
        %523 = vmatpush1.msra.mxu0 %v517
        %524 = vmatprep.subr.mxu0 0.0
        %525 = vmatpush1.msra.mxu0 0.0
        %526 = vmatprep.subr.mxu0 0.0
        %527 = vmatpush1.msra.mxu0 0.0
        %528 = vmatprep.subr.mxu0 0.0
        %529 = vmatpush1.msra.mxu0 0.0
        %530 = vmatprep.subr.mxu0 0.0
        %531 = vmatpush1.msra.mxu0 0.0
        %532 = vmatprep.subr.mxu0 0.0
        %533 = vmatpush1.msra.mxu0 0.0
        %534 = vmatprep.subr.mxu0 0.0
        %535 = vmatpush1.msra.mxu0 0.0
        %536 = vmatprep.subr.mxu0 0.0
        %537 = vmatpush1.msra.mxu0 0.0
        %538 = vmatprep.subr.mxu0 0.0
        %539 = vmatpush1.msra.mxu0 0.0
        %540 = vmatprep.subr.mxu0 0.0
        %541 = vmatpush1.msra.mxu0 0.0
        %542 = vmatprep.subr.mxu0 0.0
        %543 = vmatpush1.msra.mxu0 0.0
        %544 = vmatprep.subr.mxu0 0.0
        %545 = vmatpush1.msra.mxu0 0.0
        %546 = vmatprep.subr.mxu0 0.0
        %547 = vmatpush1.msra.mxu0 0.0
        %548 = vmatprep.subr.mxu0 0.0
        %549 = vmatpush1.msra.mxu0 0.0
        %550 = vmatprep.subr.mxu0 0.0
        %551 = vmatpush1.msra.mxu0 0.0
        %552 = vmatprep.subr.mxu0 0.0
        %553 = vmatpush1.msra.mxu0 0.0
        %554 = vmatprep.subr.mxu0 0.0
        %555 = vmatpush1.msra.mxu0 0.0
        %556 = vmatprep.subr.mxu0 0.0
        %557 = vmatpush1.msra.mxu0 0.0
        %558 = vmatprep.subr.mxu0 0.0
        %559 = vmatpush1.msra.mxu0 0.0
        %560 = vmatprep.subr.mxu0 0.0
        %561 = vmatpush1.msra.mxu0 0.0
        %562 = vmatprep.subr.mxu0 0.0
        %563 = vmatpush1.msra.mxu0 0.0
        %564 = vmatprep.subr.mxu0 0.0
        %565 = vmatpush1.msra.mxu0 0.0
        %566 = vmatprep.subr.mxu0 0.0
        %567 = vmatpush1.msra.mxu0 0.0
        %568 = vmatprep.subr.mxu0 0.0
        %569 = vmatpush1.msra.mxu0 0.0
        %570 = vmatprep.subr.mxu0 0.0
        %571 = vmatpush1.msra.mxu0 0.0
        %572 = vmatprep.subr.mxu0 0.0
        %573 = vmatpush1.msra.mxu0 0.0
        %574 = vmatprep.subr.mxu0 0.0
        %575 = vmatpush1.msra.mxu0 0.0
        %576 = vmatprep.subr.mxu0 0.0
        %577 = vmatpush1.msra.mxu0 0.0
        %578 = vmatprep.subr.mxu0 0.0
        %579 = vmatpush1.msra.mxu0 0.0
        %580 = vmatprep.subr.mxu0 0.0
        %581 = vmatpush1.msra.mxu0 0.0
        %582 = vmatprep.subr.mxu0 0.0
        %583 = vmatpush1.msra.mxu0 0.0
        %584 = vmatprep.mubr.f32.mxu0 0.0
        %585 = vmatmul.mubr.f32.gmra.mrb[0].mxu0 %v354
        %v586 = vpop.f32.mrb[0].mxu0
        %v587 = vadd.f32 0.0, %v586
        %v588 = vpop.f32.mrb[0].mxu0
        %589 = vmatprep.mubr.f32.mxu0 0.0
        %590 = vmatmul.mubr.f32.gmra.mrb[0].mxu0 %v357
        %v591 = vpop.f32.mrb[0].mxu0
        %v592 = vadd.f32 0.0, %v591
        %v593 = vpop.f32.mrb[0].mxu0
        %594 = vdwg.mxu0
        %s595 = scalar_lea.vmem %s220, 16 [#allocation10]
        %596 = vst.msk [vmem:[%s595] sm:$0xff] %vm271, %v587
        %597 = vst.msk [vmem:[%s595 + $0x8] sm:$0xff] %vm271, %v592
        %s598 = scalar_lea.vmem %s198, 32 [#allocation9]
        %v599 = vld [vmem:[%s598] sm:$0xff]
        %v600 = vld [vmem:[%s598 + $0x8] sm:$0xff]
        %v602 = vsel %vm271, %v599, 0
        %v605 = vsel %vm271, %v600, 0
        %607 = vmatprep.subr.mxu0 0.0
        %608 = vmatpush1.msra.mxu0 %v251
        %609 = vmatprep.subr.mxu0 0.0
        %610 = vmatpush1.msra.mxu0 %v252
        %611 = vmatprep.subr.mxu0 0.0
        %612 = vmatpush1.msra.mxu0 0.0
        %613 = vmatprep.subr.mxu0 0.0
        %614 = vmatpush1.msra.mxu0 0.0
        %615 = vmatprep.subr.mxu0 0.0
        %616 = vmatpush1.msra.mxu0 0.0
        %617 = vmatprep.subr.mxu0 0.0
        %618 = vmatpush1.msra.mxu0 0.0
        %619 = vmatprep.subr.mxu0 0.0
        %620 = vmatpush1.msra.mxu0 0.0
        %621 = vmatprep.subr.mxu0 0.0
        %622 = vmatpush1.msra.mxu0 0.0
        %623 = vmatprep.subr.mxu0 0.0
        %624 = vmatpush1.msra.mxu0 0.0
        %625 = vmatprep.subr.mxu0 0.0
        %626 = vmatpush1.msra.mxu0 0.0
        %627 = vmatprep.subr.mxu0 0.0
        %628 = vmatpush1.msra.mxu0 0.0
        %629 = vmatprep.subr.mxu0 0.0
        %630 = vmatpush1.msra.mxu0 0.0
        %631 = vmatprep.subr.mxu0 0.0
        %632 = vmatpush1.msra.mxu0 0.0
        %633 = vmatprep.subr.mxu0 0.0
        %634 = vmatpush1.msra.mxu0 0.0
        %635 = vmatprep.subr.mxu0 0.0
        %636 = vmatpush1.msra.mxu0 0.0
        %637 = vmatprep.subr.mxu0 0.0
        %638 = vmatpush1.msra.mxu0 0.0
        %639 = vmatprep.subr.mxu0 0.0
        %640 = vmatpush1.msra.mxu0 0.0
        %641 = vmatprep.subr.mxu0 0.0
        %642 = vmatpush1.msra.mxu0 0.0
        %643 = vmatprep.subr.mxu0 0.0
        %644 = vmatpush1.msra.mxu0 0.0
        %645 = vmatprep.subr.mxu0 0.0
        %646 = vmatpush1.msra.mxu0 0.0
        %647 = vmatprep.subr.mxu0 0.0
        %648 = vmatpush1.msra.mxu0 0.0
        %649 = vmatprep.subr.mxu0 0.0
        %650 = vmatpush1.msra.mxu0 0.0
        %651 = vmatprep.subr.mxu0 0.0
        %652 = vmatpush1.msra.mxu0 0.0
        %653 = vmatprep.subr.mxu0 0.0
        %654 = vmatpush1.msra.mxu0 0.0
        %655 = vmatprep.subr.mxu0 0.0
        %656 = vmatpush1.msra.mxu0 0.0
        %657 = vmatprep.subr.mxu0 0.0
        %658 = vmatpush1.msra.mxu0 0.0
        %659 = vmatprep.subr.mxu0 0.0
        %660 = vmatpush1.msra.mxu0 0.0
        %661 = vmatprep.subr.mxu0 0.0
        %662 = vmatpush1.msra.mxu0 0.0
        %663 = vmatprep.subr.mxu0 0.0
        %664 = vmatpush1.msra.mxu0 0.0
        %665 = vmatprep.subr.mxu0 0.0
        %666 = vmatpush1.msra.mxu0 0.0
        %667 = vmatprep.subr.mxu0 0.0
        %668 = vmatpush1.msra.mxu0 0.0
        %669 = vmatprep.subr.mxu0 0.0
        %670 = vmatpush1.msra.mxu0 0.0
        %671 = vmatprep.mubr.f32.mxu0 0.0
        %672 = vmatmul.mubr.f32.gmra.mrb[0].mxu0 %v602
        %v673 = vpop.f32.mrb[0].mxu0
        %v674 = vadd.f32 0.0, %v673
        %v675 = vpop.f32.mrb[0].mxu0
        %676 = vmatprep.mubr.f32.mxu0 0.0
        %677 = vmatmul.mubr.f32.gmra.mrb[0].mxu0 %v605
        %v678 = vpop.f32.mrb[0].mxu0
        %v679 = vadd.f32 0.0, %v678
        %v680 = vpop.f32.mrb[0].mxu0
        %681 = vdwg.mxu0
        %682 = vmatprep.subr.mxu0 0.0
        %683 = vmatpush1.msra.mxu0 %v674
        %684 = vmatprep.subr.mxu0 0.0
        %685 = vmatpush1.msra.mxu0 %v679
        %686 = vmatprep.subr.mxu0 0.0
        %687 = vmatpush1.msra.mxu0 0.0
        %688 = vmatprep.subr.mxu0 0.0
        %689 = vmatpush1.msra.mxu0 0.0
        %690 = vmatprep.subr.mxu0 0.0
        %691 = vmatpush1.msra.mxu0 0.0
        %692 = vmatprep.subr.mxu0 0.0
        %693 = vmatpush1.msra.mxu0 0.0
        %694 = vmatprep.subr.mxu0 0.0
        %695 = vmatpush1.msra.mxu0 0.0
        %696 = vmatprep.subr.mxu0 0.0
        %697 = vmatpush1.msra.mxu0 0.0
        %698 = vmatprep.subr.mxu0 0.0
        %699 = vmatpush1.msra.mxu0 0.0
        %700 = vmatprep.subr.mxu0 0.0
        %701 = vmatpush1.msra.mxu0 0.0
        %702 = vmatprep.subr.mxu0 0.0
        %703 = vmatpush1.msra.mxu0 0.0
        %704 = vmatprep.subr.mxu0 0.0
        %705 = vmatpush1.msra.mxu0 0.0
        %706 = vmatprep.subr.mxu0 0.0
        %707 = vmatpush1.msra.mxu0 0.0
        %708 = vmatprep.subr.mxu0 0.0
        %709 = vmatpush1.msra.mxu0 0.0
        %710 = vmatprep.subr.mxu0 0.0
        %711 = vmatpush1.msra.mxu0 0.0
        %712 = vmatprep.subr.mxu0 0.0
        %713 = vmatpush1.msra.mxu0 0.0
        %714 = vmatprep.subr.mxu0 0.0
        %715 = vmatpush1.msra.mxu0 0.0
        %716 = vmatprep.subr.mxu0 0.0
        %717 = vmatpush1.msra.mxu0 0.0
        %718 = vmatprep.subr.mxu0 0.0
        %719 = vmatpush1.msra.mxu0 0.0
        %720 = vmatprep.subr.mxu0 0.0
        %721 = vmatpush1.msra.mxu0 0.0
        %722 = vmatprep.subr.mxu0 0.0
        %723 = vmatpush1.msra.mxu0 0.0
        %724 = vmatprep.subr.mxu0 0.0
        %725 = vmatpush1.msra.mxu0 0.0
        %726 = vmatprep.subr.mxu0 0.0
        %727 = vmatpush1.msra.mxu0 0.0
        %728 = vmatprep.subr.mxu0 0.0
        %729 = vmatpush1.msra.mxu0 0.0
        %730 = vmatprep.subr.mxu0 0.0
        %731 = vmatpush1.msra.mxu0 0.0
        %732 = vmatprep.subr.mxu0 0.0
        %733 = vmatpush1.msra.mxu0 0.0
        %734 = vmatprep.subr.mxu0 0.0
        %735 = vmatpush1.msra.mxu0 0.0
        %736 = vmatprep.subr.mxu0 0.0
        %737 = vmatpush1.msra.mxu0 0.0
        %738 = vmatprep.subr.mxu0 0.0
        %739 = vmatpush1.msra.mxu0 0.0
        %740 = vmatprep.subr.mxu0 0.0
        %741 = vmatpush1.msra.mxu0 0.0
        %742 = vmatprep.subr.mxu0 0.0
        %743 = vmatpush1.msra.mxu0 0.0
        %744 = vmatprep.subr.mxu0 0.0
        %745 = vmatpush1.msra.mxu0 0.0
        %746 = vmatprep.mubr.f32.mxu0 0.0
        %747 = vmatmul.mubr.f32.gmra.mrb[0].mxu0 %v354
        %v748 = vpop.f32.mrb[0].mxu0
        %v749 = vadd.f32 0.0, %v748
        %v750 = vpop.f32.mrb[0].mxu0
        %751 = vmatprep.mubr.f32.mxu0 0.0
        %752 = vmatmul.mubr.f32.gmra.mrb[0].mxu0 %v357
        %v753 = vpop.f32.mrb[0].mxu0
        %v754 = vadd.f32 0.0, %v753
        %v755 = vpop.f32.mrb[0].mxu0
        %756 = vdwg.mxu0
        %s757 = scalar_lea.vmem %s220, 32 [#allocation10]
        %758 = vst.msk [vmem:[%s757] sm:$0xff] %vm271, %v749
        %759 = vst.msk [vmem:[%s757 + $0x8] sm:$0xff] %vm271, %v754
        %s760 = scalar_lea.vmem %s198, 48 [#allocation9]
        %v761 = vld [vmem:[%s760] sm:$0xff]
        %v762 = vld [vmem:[%s760 + $0x8] sm:$0xff]
        %v764 = vsel %vm271, %v761, 0
        %v767 = vsel %vm271, %v762, 0
        %769 = vmatprep.subr.mxu0 0.0
        %770 = vmatpush1.msra.mxu0 %v251
        %771 = vmatprep.subr.mxu0 0.0
        %772 = vmatpush1.msra.mxu0 %v252
        %773 = vmatprep.subr.mxu0 0.0
        %774 = vmatpush1.msra.mxu0 0.0
        %775 = vmatprep.subr.mxu0 0.0
        %776 = vmatpush1.msra.mxu0 0.0
        %777 = vmatprep.subr.mxu0 0.0
        %778 = vmatpush1.msra.mxu0 0.0
        %779 = vmatprep.subr.mxu0 0.0
        %780 = vmatpush1.msra.mxu0 0.0
        %781 = vmatprep.subr.mxu0 0.0
        %782 = vmatpush1.msra.mxu0 0.0
        %783 = vmatprep.subr.mxu0 0.0
        %784 = vmatpush1.msra.mxu0 0.0
        %785 = vmatprep.subr.mxu0 0.0
        %786 = vmatpush1.msra.mxu0 0.0
        %787 = vmatprep.subr.mxu0 0.0
        %788 = vmatpush1.msra.mxu0 0.0
        %789 = vmatprep.subr.mxu0 0.0
        %790 = vmatpush1.msra.mxu0 0.0
        %791 = vmatprep.subr.mxu0 0.0
        %792 = vmatpush1.msra.mxu0 0.0
        %793 = vmatprep.subr.mxu0 0.0
        %794 = vmatpush1.msra.mxu0 0.0
        %795 = vmatprep.subr.mxu0 0.0
        %796 = vmatpush1.msra.mxu0 0.0
        %797 = vmatprep.subr.mxu0 0.0
        %798 = vmatpush1.msra.mxu0 0.0
        %799 = vmatprep.subr.mxu0 0.0
        %800 = vmatpush1.msra.mxu0 0.0
        %801 = vmatprep.subr.mxu0 0.0
        %802 = vmatpush1.msra.mxu0 0.0
        %803 = vmatprep.subr.mxu0 0.0
        %804 = vmatpush1.msra.mxu0 0.0
        %805 = vmatprep.subr.mxu0 0.0
        %806 = vmatpush1.msra.mxu0 0.0
        %807 = vmatprep.subr.mxu0 0.0
        %808 = vmatpush1.msra.mxu0 0.0
        %809 = vmatprep.subr.mxu0 0.0
        %810 = vmatpush1.msra.mxu0 0.0
        %811 = vmatprep.subr.mxu0 0.0
        %812 = vmatpush1.msra.mxu0 0.0
        %813 = vmatprep.subr.mxu0 0.0
        %814 = vmatpush1.msra.mxu0 0.0
        %815 = vmatprep.subr.mxu0 0.0
        %816 = vmatpush1.msra.mxu0 0.0
        %817 = vmatprep.subr.mxu0 0.0
        %818 = vmatpush1.msra.mxu0 0.0
        %819 = vmatprep.subr.mxu0 0.0
        %820 = vmatpush1.msra.mxu0 0.0
        %821 = vmatprep.subr.mxu0 0.0
        %822 = vmatpush1.msra.mxu0 0.0
        %823 = vmatprep.subr.mxu0 0.0
        %824 = vmatpush1.msra.mxu0 0.0
        %825 = vmatprep.subr.mxu0 0.0
        %826 = vmatpush1.msra.mxu0 0.0
        %827 = vmatprep.subr.mxu0 0.0
        %828 = vmatpush1.msra.mxu0 0.0
        %829 = vmatprep.subr.mxu0 0.0
        %830 = vmatpush1.msra.mxu0 0.0
        %831 = vmatprep.subr.mxu0 0.0
        %832 = vmatpush1.msra.mxu0 0.0
        %833 = vmatprep.mubr.f32.mxu0 0.0
        %834 = vmatmul.mubr.f32.gmra.mrb[0].mxu0 %v764
        %v835 = vpop.f32.mrb[0].mxu0
        %v836 = vadd.f32 0.0, %v835
        %v837 = vpop.f32.mrb[0].mxu0
        %838 = vmatprep.mubr.f32.mxu0 0.0
        %839 = vmatmul.mubr.f32.gmra.mrb[0].mxu0 %v767
        %v840 = vpop.f32.mrb[0].mxu0
        %v841 = vadd.f32 0.0, %v840
        %v842 = vpop.f32.mrb[0].mxu0
        %843 = vdwg.mxu0
        %844 = vmatprep.subr.mxu0 0.0
        %845 = vmatpush1.msra.mxu0 %v836
        %846 = vmatprep.subr.mxu0 0.0
        %847 = vmatpush1.msra.mxu0 %v841
        %848 = vmatprep.subr.mxu0 0.0
        %849 = vmatpush1.msra.mxu0 0.0
        %850 = vmatprep.subr.mxu0 0.0
        %851 = vmatpush1.msra.mxu0 0.0
        %852 = vmatprep.subr.mxu0 0.0
        %853 = vmatpush1.msra.mxu0 0.0
        %854 = vmatprep.subr.mxu0 0.0
        %855 = vmatpush1.msra.mxu0 0.0
        %856 = vmatprep.subr.mxu0 0.0
        %857 = vmatpush1.msra.mxu0 0.0
        %858 = vmatprep.subr.mxu0 0.0
        %859 = vmatpush1.msra.mxu0 0.0
        %860 = vmatprep.subr.mxu0 0.0
        %861 = vmatpush1.msra.mxu0 0.0
        %862 = vmatprep.subr.mxu0 0.0
        %863 = vmatpush1.msra.mxu0 0.0
        %864 = vmatprep.subr.mxu0 0.0
        %865 = vmatpush1.msra.mxu0 0.0
        %866 = vmatprep.subr.mxu0 0.0
        %867 = vmatpush1.msra.mxu0 0.0
        %868 = vmatprep.subr.mxu0 0.0
        %869 = vmatpush1.msra.mxu0 0.0
        %870 = vmatprep.subr.mxu0 0.0
        %871 = vmatpush1.msra.mxu0 0.0
        %872 = vmatprep.subr.mxu0 0.0
        %873 = vmatpush1.msra.mxu0 0.0
        %874 = vmatprep.subr.mxu0 0.0
        %875 = vmatpush1.msra.mxu0 0.0
        %876 = vmatprep.subr.mxu0 0.0
        %877 = vmatpush1.msra.mxu0 0.0
        %878 = vmatprep.subr.mxu0 0.0
        %879 = vmatpush1.msra.mxu0 0.0
        %880 = vmatprep.subr.mxu0 0.0
        %881 = vmatpush1.msra.mxu0 0.0
        %882 = vmatprep.subr.mxu0 0.0
        %883 = vmatpush1.msra.mxu0 0.0
        %884 = vmatprep.subr.mxu0 0.0
        %885 = vmatpush1.msra.mxu0 0.0
        %886 = vmatprep.subr.mxu0 0.0
        %887 = vmatpush1.msra.mxu0 0.0
        %888 = vmatprep.subr.mxu0 0.0
        %889 = vmatpush1.msra.mxu0 0.0
        %890 = vmatprep.subr.mxu0 0.0
        %891 = vmatpush1.msra.mxu0 0.0
        %892 = vmatprep.subr.mxu0 0.0
        %893 = vmatpush1.msra.mxu0 0.0
        %894 = vmatprep.subr.mxu0 0.0
        %895 = vmatpush1.msra.mxu0 0.0
        %896 = vmatprep.subr.mxu0 0.0
        %897 = vmatpush1.msra.mxu0 0.0
        %898 = vmatprep.subr.mxu0 0.0
        %899 = vmatpush1.msra.mxu0 0.0
        %900 = vmatprep.subr.mxu0 0.0
        %901 = vmatpush1.msra.mxu0 0.0
        %902 = vmatprep.subr.mxu0 0.0
        %903 = vmatpush1.msra.mxu0 0.0
        %904 = vmatprep.subr.mxu0 0.0
        %905 = vmatpush1.msra.mxu0 0.0
        %906 = vmatprep.subr.mxu0 0.0
        %907 = vmatpush1.msra.mxu0 0.0
        %908 = vmatprep.mubr.f32.mxu0 0.0
        %909 = vmatmul.mubr.f32.gmra.mrb[0].mxu0 %v354
        %v910 = vpop.f32.mrb[0].mxu0
        %v911 = vadd.f32 0.0, %v910
        %v912 = vpop.f32.mrb[0].mxu0
        %913 = vmatprep.mubr.f32.mxu0 0.0
        %914 = vmatmul.mubr.f32.gmra.mrb[0].mxu0 %v357
        %v915 = vpop.f32.mrb[0].mxu0
        %v916 = vadd.f32 0.0, %v915
        %v917 = vpop.f32.mrb[0].mxu0
        %918 = vdwg.mxu0
        %s919 = scalar_lea.vmem %s220, 48 [#allocation10]
        %920 = vst.msk [vmem:[%s919] sm:$0xff] %vm271, %v911
        %921 = vst.msk [vmem:[%s919 + $0x8] sm:$0xff] %vm271, %v916
        %s922 = sand.u32 %s100, 1
        %s923 = scalar_lea.sflag [#allocation6], %s922
        %s924 = sand.u32 %s100, 1
        %s925 = smul.addr %s924, 64
        %s926 = scalar_lea.vmem [#allocation10], %s925
        // Predicated region
        $region45: #{tpu_custom_call.1} parent=31 // pred_check
          %p927 = pneg %p110
        $region46: #{tpu_custom_call.1} parent=31 // pred_check_branch
          %929 = sbr.rel (%p927) target = $region48
        $region47: #{tpu_custom_call.1} parent=31 // pred_region
          %s931 = ssub.s32 1024, 1024
          %932 = vsyncadd %s923, %s931
          %s933 = smul.addr %s24, 8
          %s934 = smul.addr %s933, 128
          %s935 = scalar_lea.hbm %s4, %s934
          %s936 = sshll.u32 %s926, 4
          %s937 = int_to_ptr.vmem [resolvable:$true] %s936
          %942 = dma.vmem_to_hbm [thread:$0]  %s937, 1024, %s935, %s923, 128, 128, 8
        $region48: #{tpu_custom_call.1} parent=31 // pred_fallthru
          _
      $region32: #{tpu_custom_call.1} parent=5 // pred_fallthru
        _
      %p943 = scmp.le.s32.totalorder 2, %s19
      // Predicated region
      $region49: #{tpu_custom_call.1} parent=5 // pred_check
        %p944 = pneg %p943
      $region50: #{tpu_custom_call.1} parent=5 // pred_check_branch
        %946 = sbr.rel (%p944) target = $region52
      $region51: #{tpu_custom_call.1} parent=5 // pred_region
        %s947 = ssub.s32 %s19, 2
        // Predicated region
        $region53: #{tpu_custom_call.1} parent=51 // pred_check
          %p948 = pneg %p116
        $region54: #{tpu_custom_call.1} parent=51 // pred_check_branch
          %950 = sbr.rel (%p948) target = $region56
        $region55: #{tpu_custom_call.1} parent=51 // pred_region
          %s951 = sand.u32 %s101, 1
          %s952 = scalar_lea.sflag [#allocation6], %s951
          %s953 = sand.u32 %s101, 1
          %s954 = smul.addr %s953, 64
          %s955 = scalar_lea.vmem [#allocation10], %s954
          %956 = dma.done %s952, 1024
        $region56: #{tpu_custom_call.1} parent=51 // pred_fallthru
          _
      $region52: #{tpu_custom_call.1} parent=5 // pred_fallthru
        _
    $region6: #{tpu_custom_call.1} parent=1 // loop_footer
      %s23 = sadd.s32 1, %s19
    $region7: #{tpu_custom_call.1} parent=1 // loop_footer_branch
      %18 = sbr.rel target = $region3
    $region8: #{tpu_custom_call.1} parent=1 // loop_exit
      _
    %957 = vsyncpa [#allocation5], 1
    %s958 = scalar_lea.sflag [#allocation5], 1
    %959 = vsyncpa %s958, 1
    %960 = vsyncpa [#allocation8], 1
    %961 = vsyncpa [#allocation6], 1
    %s962 = scalar_lea.sflag [#allocation6], 1
    %963 = vsyncpa %s962, 1

</llo_original>
